<compile_context>
chip_gen: v7x
topology: tpu7x:2x2x1
jax: 0.10.0
libtpu: 0.0.40
codegen_flags: <defaults>
</compile_context>

<pallas_src>
import jax
import jax.numpy as jnp
from jax.experimental import pallas as pl
from jax.experimental.pallas import tpu as pltpu

INPUT_DIM = 2
HIDDEN_DIM = 64
LATENT_DIM = 2
PAD = 128            # lane-dense width used inside the kernel / for the packed output

# packed-output lane offsets
MU_OFF = 0
LV_OFF = 64
RC_OFF = 96

# compact packed-input layout (x | eps), 8 lanes total
XE_W = 8
EPS_OFF = 4

# rows inside the small (16,128) parameter slab
ROW_W1 = 0           # rows 0..1  : encoder.0 weight rows (per input feature)
ROW_WD1 = 2          # rows 2..3  : decoder.0 weight rows (per latent feature)
ROW_B1, ROW_B2, ROW_BH, ROW_BD1, ROW_BD2, ROW_BD3 = 8, 9, 10, 11, 12, 13

assert MU_OFF + LATENT_DIM <= LV_OFF
assert LV_OFF + LATENT_DIM <= RC_OFF
assert RC_OFF + INPUT_DIM <= PAD
assert HIDDEN_DIM <= PAD
assert INPUT_DIM <= EPS_OFF and EPS_OFF + LATENT_DIM <= XE_W


def _round_up(v, m):
    return ((v + m - 1) // m) * m


# ------------------------- Pallas kernel: full VAE forward -------------------------
def vae_kernel(xe_ref, w_ref, v_ref, out_ref):
    """One batch tile of the VAE forward.

    xe_ref : (TB, 8)  compact input: x lanes [0,INPUT_DIM), eps lanes [4,4+LATENT_DIM).
    w_ref  : (4, 128, 128) pre-padded matmul weights
             [0]=enc.2, [1]=fused mu||logvar head, [2]=dec.2, [3]=dec.4 (cols at 96..).
    v_ref  : (16, 128) small params: rank-2 weight rows (0..3) and biases (8..13).
    out_ref: (TB, 128) packed output: mu [0,2), logvar [64,66), recon [96,98).
    """
    xe = xe_ref[...]
    v = v_ref[...]

    # ----- encoder.0 as a VPU rank-2 update (K=2 MXU pass elided) -----
    h = v[ROW_B1:ROW_B1 + 1, :]
    for j in range(INPUT_DIM):
        h = h + xe[:, j:j + 1] * v[ROW_W1 + j:ROW_W1 + j + 1, :]
    h = jnp.maximum(h, 0.0)

    # ----- encoder.2 -----
    h = jnp.dot(h, w_ref[0], preferred_element_type=jnp.float32) + v[ROW_B2:ROW_B2 + 1, :]
    h = jnp.maximum(h, 0.0)

    # ----- fused latent heads: one matmul -> mu (lanes 0..) and logvar (lanes 64..) -----
    mulv = jnp.dot(h, w_ref[1], preferred_element_type=jnp.float32) + v[ROW_BH:ROW_BH + 1, :]

    # ----- reparameterize (z = mu + eps * exp(0.5*logvar)) + decoder.0 rank-2 update -----
    d = v[ROW_BD1:ROW_BD1 + 1, :]
    for j in range(LATENT_DIM):
        std_j = jnp.exp(0.5 * mulv[:, LV_OFF + j:LV_OFF + j + 1])
        z_j = mulv[:, MU_OFF + j:MU_OFF + j + 1] + xe[:, EPS_OFF + j:EPS_OFF + j + 1] * std_j
        d = d + z_j * v[ROW_WD1 + j:ROW_WD1 + j + 1, :]
    d = jnp.maximum(d, 0.0)

    # ----- decoder.2 -----
    d = jnp.dot(d, w_ref[2], preferred_element_type=jnp.float32) + v[ROW_BD2:ROW_BD2 + 1, :]
    d = jnp.maximum(d, 0.0)

    # ----- decoder.4 + sigmoid; its columns were pre-placed at lanes [96, 96+INPUT_DIM) -----
    logits = jnp.dot(d, w_ref[3], preferred_element_type=jnp.float32) + v[ROW_BD3:ROW_BD3 + 1, :]
    recon = pl.reciprocal(1.0 + jnp.exp(-logits))        # exact sigmoid

    # ----- single lane-dense packed writeback: mu | logvar | recon -----
    lane = jax.lax.broadcasted_iota(jnp.int32, recon.shape, 1)
    is_recon = (lane >= RC_OFF) & (lane < RC_OFF + INPUT_DIM)
    out_ref[...] = jnp.where(is_recon, recon, mulv)


# ---------------------- one-time parameter packing (hoisted) -----------------------
def pack_params(params):
    """Pad & pack all weights/biases ONCE, outside the per-call hot path."""
    (w1, b1), (w2, b2), (wmu, bmu), (wlv, blv), (wd1, bd1), (wd2, bd2), (wd3, bd3) = params

    W = jnp.zeros((4, PAD, PAD), jnp.float32)
    W = W.at[0, :HIDDEN_DIM, :HIDDEN_DIM].set(w2.astype(jnp.float32))                       # enc.2
    W = W.at[1, :HIDDEN_DIM, MU_OFF:MU_OFF + LATENT_DIM].set(wmu.astype(jnp.float32))       # mu head
    W = W.at[1, :HIDDEN_DIM, LV_OFF:LV_OFF + LATENT_DIM].set(wlv.astype(jnp.float32))       # logvar head
    W = W.at[2, :HIDDEN_DIM, :HIDDEN_DIM].set(wd2.astype(jnp.float32))                      # dec.2
    W = W.at[3, :HIDDEN_DIM, RC_OFF:RC_OFF + INPUT_DIM].set(wd3.astype(jnp.float32))        # dec.4

    V = jnp.zeros((16, PAD), jnp.float32)
    for j in range(INPUT_DIM):
        V = V.at[ROW_W1 + j, :HIDDEN_DIM].set(w1[j, :].astype(jnp.float32))                 # enc.0 rows
    for j in range(LATENT_DIM):
        V = V.at[ROW_WD1 + j, :HIDDEN_DIM].set(wd1[j, :].astype(jnp.float32))               # dec.0 rows
    V = V.at[ROW_B1, :HIDDEN_DIM].set(b1.astype(jnp.float32))
    V = V.at[ROW_B2, :HIDDEN_DIM].set(b2.astype(jnp.float32))
    V = V.at[ROW_BH, MU_OFF:MU_OFF + LATENT_DIM].set(bmu.astype(jnp.float32))
    V = V.at[ROW_BH, LV_OFF:LV_OFF + LATENT_DIM].set(blv.astype(jnp.float32))
    V = V.at[ROW_BD1, :HIDDEN_DIM].set(bd1.astype(jnp.float32))
    V = V.at[ROW_BD2, :HIDDEN_DIM].set(bd2.astype(jnp.float32))
    V = V.at[ROW_BD3, RC_OFF:RC_OFF + INPUT_DIM].set(bd3.astype(jnp.float32))
    return jax.device_put(W), jax.device_put(V)


# ----------------------------------- wrapper ---------------------------------------
@jax.jit
def vae_forward(x, eps, W, V):
    """x: [B, INPUT_DIM], eps: [B, LATENT_DIM] -> (recon [B, INPUT_DIM], mu, logvar)."""
    B = x.shape[0]
    Bp8 = _round_up(B, 8)
    if Bp8 <= 256:
        n_tiles = 1
    else:
        # >= 2 tiles so the "parallel" axis can use both v7x TensorCores; tiles <= ~1K rows
        n_tiles = max(2, -(-Bp8 // 1024))
    TB = _round_up(-(-Bp8 // n_tiles), 8)
    Bp = n_tiles * TB

    # compact packed input (x | eps) — no 128-lane HBM padding, one tiny pad/pack pass
    xe = jnp.zeros((Bp, XE_W), jnp.float32)
    xe = xe.at[:B, :INPUT_DIM].set(x.astype(jnp.float32))
    xe = xe.at[:B, EPS_OFF:EPS_OFF + LATENT_DIM].set(eps.astype(jnp.float32))

    out = pl.pallas_call(
        vae_kernel,
        out_shape=jax.ShapeDtypeStruct((Bp, PAD), jnp.float32),   # packed mu | logvar | recon
        grid=(n_tiles,),
        in_specs=[
            pl.BlockSpec((TB, XE_W), lambda i: (i, 0)),           # compact x|eps tile
            pl.BlockSpec((4, PAD, PAD), lambda i: (0, 0, 0)),     # matmul weights, VMEM-resident
            pl.BlockSpec((16, PAD), lambda i: (0, 0)),            # rank-2 rows + biases, resident
        ],
        out_specs=pl.BlockSpec((TB, PAD), lambda i: (i, 0)),
        compiler_params=pltpu.CompilerParams(
            dimension_semantics=("parallel",),
        ),
    )(xe, W, V)

    mu = out[:B, MU_OFF:MU_OFF + LATENT_DIM]
    logvar = out[:B, LV_OFF:LV_OFF + LATENT_DIM]
    recon = out[:B, RC_OFF:RC_OFF + INPUT_DIM]
    return recon, mu, logvar


# ------------------------------ parameter creation ---------------------------------
def linear_params(key, fan_in, fan_out):
    # PyTorch nn.Linear default init: U(-1/sqrt(fan_in), 1/sqrt(fan_in)) for W and b.
    kw, kb = jax.random.split(key)
    bound = 1.0 / (fan_in ** 0.5)
    # stored as (in, out) so forward is x @ W + b (== PyTorch's x @ W_pt.T + b)
    w = jax.random.uniform(kw, (fan_in, fan_out), jnp.float32, -bound, bound)
    b = jax.random.uniform(kb, (fan_out,), jnp.float32, -bound, bound)
    return w, b


def init_vae_params(key):
    keys = jax.random.split(key, 7)
    return (
        linear_params(keys[0], INPUT_DIM, HIDDEN_DIM),   # encoder.0
        linear_params(keys[1], HIDDEN_DIM, HIDDEN_DIM),  # encoder.2
        linear_params(keys[2], HIDDEN_DIM, LATENT_DIM),  # fc_mu
        linear_params(keys[3], HIDDEN_DIM, LATENT_DIM),  # fc_logvar
        linear_params(keys[4], LATENT_DIM, HIDDEN_DIM),  # decoder.0
        linear_params(keys[5], HIDDEN_DIM, HIDDEN_DIM),  # decoder.2
        linear_params(keys[6], HIDDEN_DIM, INPUT_DIM),   # decoder.4
    )


# ------------------------------- pure-JAX reference ---------------------------------
def vae_ref(x, eps, params):
    hp = jax.lax.Precision.HIGHEST   # full-f32 matmuls so the reference matches the kernel
    (w1, b1), (w2, b2), (wmu, bmu), (wlv, blv), (wd1, bd1), (wd2, bd2), (wd3, bd3) = params
    h = jnp.maximum(jnp.dot(x, w1, precision=hp) + b1, 0.0)
    h = jnp.maximum(jnp.dot(h, w2, precision=hp) + b2, 0.0)
    mu = jnp.dot(h, wmu, precision=hp) + bmu
    logvar = jnp.dot(h, wlv, precision=hp) + blv
    z = mu + eps * jnp.exp(0.5 * logvar)
    d = jnp.maximum(jnp.dot(z, wd1, precision=hp) + bd1, 0.0)
    d = jnp.maximum(jnp.dot(d, wd2, precision=hp) + bd2, 0.0)
    recon = jax.nn.sigmoid(jnp.dot(d, wd3, precision=hp) + bd3)
    return recon, mu, logvar


if __name__ == "__main__":
    key = jax.random.PRNGKey(0)
    k_params, k_x, k_eps = jax.random.split(key, 3)

    B = 8
    params = init_vae_params(k_params)
    W, V = pack_params(params)   # one-time padding/packing, hoisted out of the hot path

    x = jax.random.uniform(k_x, (B, INPUT_DIM), jnp.float32)
    # TODO(synk): torch.randn_like inside reparameterize is replaced by a host-side
    # deterministic eps draw passed into the kernel (same distribution, fixed seed).
    eps = jax.random.normal(k_eps, (B, LATENT_DIM), jnp.float32)

    recon, mu, logvar = vae_forward(x, eps, W, V)
    jax.block_until_ready((recon, mu, logvar))

    recon_r, mu_r, logvar_r = vae_ref(x, eps, params)
    assert jnp.allclose(recon, recon_r, atol=1e-4, rtol=1e-4)
    assert jnp.allclose(mu, mu_r, atol=1e-4, rtol=1e-4)
    assert jnp.allclose(logvar, logvar_r, atol=1e-4, rtol=1e-4)

    print("KERNEL_OK")
</pallas_src>

<mosaic_0001>
module attributes {stable_mosaic.version = 11 : i64} {
  func.func @vae_kernel(%arg0: i32, %arg1: memref<8x8xf32, #tpu.memory_space<vmem>>, %arg2: memref<4x128x128xf32, #tpu.memory_space<vmem>>, %arg3: memref<16x128xf32, #tpu.memory_space<vmem>>, %arg4: memref<8x128xf32, #tpu.memory_space<vmem>>) attributes {dimension_semantics = [#tpu.dimension_semantics<parallel>], iteration_bounds = array<i64: 1>, scalar_prefetch = 0 : i64, scratch_operands = 0 : i64, tpu.core_type = #tpu.core_type<tc>, window_params = [{transform_indices = @transform_0, window_bounds = array<i64: 8, 8>}, {pipeline_mode = #tpu.pipeline_mode<synchronous>, transform_indices = @transform_1, window_bounds = array<i64: 4, 128, 128>}, {pipeline_mode = #tpu.pipeline_mode<synchronous>, transform_indices = @transform_2, window_bounds = array<i64: 16, 128>}, {transform_indices = @transform_3, window_bounds = array<i64: 8, 128>}]} {
    %c0 = arith.constant 0 : index
    %c0_0 = arith.constant 0 : index
    %0 = vector.load %arg1[%c0, %c0_0] : memref<8x8xf32, #tpu.memory_space<vmem>>, vector<8x8xf32>
    %c0_1 = arith.constant 0 : index
    %c0_2 = arith.constant 0 : index
    %1 = vector.load %arg3[%c0_1, %c0_2] : memref<16x128xf32, #tpu.memory_space<vmem>>, vector<16x128xf32>
    %2 = vector.extract_strided_slice %1 {offsets = [8, 0], sizes = [1, 128], strides = [1, 1]} : vector<16x128xf32> to vector<1x128xf32>
    %3 = vector.extract_strided_slice %0 {offsets = [0, 0], sizes = [8, 1], strides = [1, 1]} : vector<8x8xf32> to vector<8x1xf32>
    %4 = vector.extract_strided_slice %1 {offsets = [0, 0], sizes = [1, 128], strides = [1, 1]} : vector<16x128xf32> to vector<1x128xf32>
    %5 = vector.broadcast %3 : vector<8x1xf32> to vector<8x128xf32>
    %6 = vector.broadcast %4 : vector<1x128xf32> to vector<8x128xf32>
    %7 = arith.mulf %5, %6 : vector<8x128xf32>
    %8 = vector.broadcast %2 : vector<1x128xf32> to vector<8x128xf32>
    %9 = arith.addf %8, %7 : vector<8x128xf32>
    %10 = vector.extract_strided_slice %0 {offsets = [0, 1], sizes = [8, 1], strides = [1, 1]} : vector<8x8xf32> to vector<8x1xf32>
    %11 = vector.extract_strided_slice %1 {offsets = [1, 0], sizes = [1, 128], strides = [1, 1]} : vector<16x128xf32> to vector<1x128xf32>
    %12 = vector.broadcast %10 : vector<8x1xf32> to vector<8x128xf32>
    %13 = vector.broadcast %11 : vector<1x128xf32> to vector<8x128xf32>
    %14 = arith.mulf %12, %13 : vector<8x128xf32>
    %15 = arith.addf %9, %14 : vector<8x128xf32>
    %cst = arith.constant 0.000000e+00 : f32
    %16 = vector.broadcast %cst : f32 to vector<8x128xf32>
    %17 = arith.maximumf %15, %16 : vector<8x128xf32>
    %c0_3 = arith.constant 0 : index
    %c0_4 = arith.constant 0 : index
    %c0_5 = arith.constant 0 : index
    %18 = vector.load %arg2[%c0_3, %c0_4, %c0_5] : memref<4x128x128xf32, #tpu.memory_space<vmem>>, vector<1x128x128xf32>
    %19 = vector.shape_cast %18 : vector<1x128x128xf32> to vector<128x128xf32>
    %cst_6 = arith.constant dense<0.000000e+00> : vector<8x128xf32>
    %20 = tpu.matmul %17, %19, %cst_6 {dimension_numbers = #tpu.dot_dimension_numbers<[1], [0], [0], [1], [0, 0, 1, 1], [], []>} : vector<8x128xf32>, vector<128x128xf32>, vector<8x128xf32> -> vector<8x128xf32>
    %21 = vector.extract_strided_slice %1 {offsets = [9, 0], sizes = [1, 128], strides = [1, 1]} : vector<16x128xf32> to vector<1x128xf32>
    %22 = vector.broadcast %21 : vector<1x128xf32> to vector<8x128xf32>
    %23 = arith.addf %20, %22 : vector<8x128xf32>
    %cst_7 = arith.constant 0.000000e+00 : f32
    %24 = vector.broadcast %cst_7 : f32 to vector<8x128xf32>
    %25 = arith.maximumf %23, %24 : vector<8x128xf32>
    %c1 = arith.constant 1 : index
    %c0_8 = arith.constant 0 : index
    %c0_9 = arith.constant 0 : index
    %26 = vector.load %arg2[%c1, %c0_8, %c0_9] : memref<4x128x128xf32, #tpu.memory_space<vmem>>, vector<1x128x128xf32>
    %27 = vector.shape_cast %26 : vector<1x128x128xf32> to vector<128x128xf32>
    %cst_10 = arith.constant dense<0.000000e+00> : vector<8x128xf32>
    %28 = tpu.matmul %25, %27, %cst_10 {dimension_numbers = #tpu.dot_dimension_numbers<[1], [0], [0], [1], [0, 0, 1, 1], [], []>} : vector<8x128xf32>, vector<128x128xf32>, vector<8x128xf32> -> vector<8x128xf32>
    %29 = vector.extract_strided_slice %1 {offsets = [10, 0], sizes = [1, 128], strides = [1, 1]} : vector<16x128xf32> to vector<1x128xf32>
    %30 = vector.broadcast %29 : vector<1x128xf32> to vector<8x128xf32>
    %31 = arith.addf %28, %30 : vector<8x128xf32>
    %32 = vector.extract_strided_slice %1 {offsets = [11, 0], sizes = [1, 128], strides = [1, 1]} : vector<16x128xf32> to vector<1x128xf32>
    %33 = vector.extract_strided_slice %31 {offsets = [0, 64], sizes = [8, 1], strides = [1, 1]} : vector<8x128xf32> to vector<8x1xf32>
    %cst_11 = arith.constant 5.000000e-01 : f32
    %34 = vector.broadcast %cst_11 : f32 to vector<8x1xf32>
    %35 = arith.mulf %34, %33 : vector<8x1xf32>
    %36 = math.exp %35 : vector<8x1xf32>
    %37 = vector.extract_strided_slice %31 {offsets = [0, 0], sizes = [8, 1], strides = [1, 1]} : vector<8x128xf32> to vector<8x1xf32>
    %38 = vector.extract_strided_slice %0 {offsets = [0, 4], sizes = [8, 1], strides = [1, 1]} : vector<8x8xf32> to vector<8x1xf32>
    %39 = arith.mulf %38, %36 : vector<8x1xf32>
    %40 = arith.addf %37, %39 : vector<8x1xf32>
    %41 = vector.extract_strided_slice %1 {offsets = [2, 0], sizes = [1, 128], strides = [1, 1]} : vector<16x128xf32> to vector<1x128xf32>
    %42 = vector.broadcast %40 : vector<8x1xf32> to vector<8x128xf32>
    %43 = vector.broadcast %41 : vector<1x128xf32> to vector<8x128xf32>
    %44 = arith.mulf %42, %43 : vector<8x128xf32>
    %45 = vector.broadcast %32 : vector<1x128xf32> to vector<8x128xf32>
    %46 = arith.addf %45, %44 : vector<8x128xf32>
    %47 = vector.extract_strided_slice %31 {offsets = [0, 65], sizes = [8, 1], strides = [1, 1]} : vector<8x128xf32> to vector<8x1xf32>
    %cst_12 = arith.constant 5.000000e-01 : f32
    %48 = vector.broadcast %cst_12 : f32 to vector<8x1xf32>
    %49 = arith.mulf %48, %47 : vector<8x1xf32>
    %50 = math.exp %49 : vector<8x1xf32>
    %51 = vector.extract_strided_slice %31 {offsets = [0, 1], sizes = [8, 1], strides = [1, 1]} : vector<8x128xf32> to vector<8x1xf32>
    %52 = vector.extract_strided_slice %0 {offsets = [0, 5], sizes = [8, 1], strides = [1, 1]} : vector<8x8xf32> to vector<8x1xf32>
    %53 = arith.mulf %52, %50 : vector<8x1xf32>
    %54 = arith.addf %51, %53 : vector<8x1xf32>
    %55 = vector.extract_strided_slice %1 {offsets = [3, 0], sizes = [1, 128], strides = [1, 1]} : vector<16x128xf32> to vector<1x128xf32>
    %56 = vector.broadcast %54 : vector<8x1xf32> to vector<8x128xf32>
    %57 = vector.broadcast %55 : vector<1x128xf32> to vector<8x128xf32>
    %58 = arith.mulf %56, %57 : vector<8x128xf32>
    %59 = arith.addf %46, %58 : vector<8x128xf32>
    %cst_13 = arith.constant 0.000000e+00 : f32
    %60 = vector.broadcast %cst_13 : f32 to vector<8x128xf32>
    %61 = arith.maximumf %59, %60 : vector<8x128xf32>
    %c2 = arith.constant 2 : index
    %c0_14 = arith.constant 0 : index
    %c0_15 = arith.constant 0 : index
    %62 = vector.load %arg2[%c2, %c0_14, %c0_15] : memref<4x128x128xf32, #tpu.memory_space<vmem>>, vector<1x128x128xf32>
    %63 = vector.shape_cast %62 : vector<1x128x128xf32> to vector<128x128xf32>
    %cst_16 = arith.constant dense<0.000000e+00> : vector<8x128xf32>
    %64 = tpu.matmul %61, %63, %cst_16 {dimension_numbers = #tpu.dot_dimension_numbers<[1], [0], [0], [1], [0, 0, 1, 1], [], []>} : vector<8x128xf32>, vector<128x128xf32>, vector<8x128xf32> -> vector<8x128xf32>
    %65 = vector.extract_strided_slice %1 {offsets = [12, 0], sizes = [1, 128], strides = [1, 1]} : vector<16x128xf32> to vector<1x128xf32>
    %66 = vector.broadcast %65 : vector<1x128xf32> to vector<8x128xf32>
    %67 = arith.addf %64, %66 : vector<8x128xf32>
    %cst_17 = arith.constant 0.000000e+00 : f32
    %68 = vector.broadcast %cst_17 : f32 to vector<8x128xf32>
    %69 = arith.maximumf %67, %68 : vector<8x128xf32>
    %c3 = arith.constant 3 : index
    %c0_18 = arith.constant 0 : index
    %c0_19 = arith.constant 0 : index
    %70 = vector.load %arg2[%c3, %c0_18, %c0_19] : memref<4x128x128xf32, #tpu.memory_space<vmem>>, vector<1x128x128xf32>
    %71 = vector.shape_cast %70 : vector<1x128x128xf32> to vector<128x128xf32>
    %cst_20 = arith.constant dense<0.000000e+00> : vector<8x128xf32>
    %72 = tpu.matmul %69, %71, %cst_20 {dimension_numbers = #tpu.dot_dimension_numbers<[1], [0], [0], [1], [0, 0, 1, 1], [], []>} : vector<8x128xf32>, vector<128x128xf32>, vector<8x128xf32> -> vector<8x128xf32>
    %73 = vector.extract_strided_slice %1 {offsets = [13, 0], sizes = [1, 128], strides = [1, 1]} : vector<16x128xf32> to vector<1x128xf32>
    %74 = vector.broadcast %73 : vector<1x128xf32> to vector<8x128xf32>
    %75 = arith.addf %72, %74 : vector<8x128xf32>
    %cst_21 = arith.constant 0.000000e+00 : f32
    %76 = vector.broadcast %cst_21 : f32 to vector<8x128xf32>
    %77 = arith.subf %76, %75 : vector<8x128xf32>
    %78 = math.exp %77 : vector<8x128xf32>
    %cst_22 = arith.constant 1.000000e+00 : f32
    %79 = vector.broadcast %cst_22 : f32 to vector<8x128xf32>
    %80 = arith.addf %79, %78 : vector<8x128xf32>
    %81 = tpu.reciprocal %80 : vector<8x128xf32> -> vector<8x128xf32>
    %82 = tpu.iota {dimensions = array<i32: 1>} : vector<8x128xi32>
    %c96_i32 = arith.constant 96 : i32
    %83 = vector.broadcast %c96_i32 : i32 to vector<8x128xi32>
    %84 = arith.cmpi sge, %82, %83 : vector<8x128xi32>
    %c98_i32 = arith.constant 98 : i32
    %85 = vector.broadcast %c98_i32 : i32 to vector<8x128xi32>
    %86 = arith.cmpi slt, %82, %85 : vector<8x128xi32>
    %87 = arith.andi %84, %86 : vector<8x128xi1>
    %88 = arith.select %87, %81, %31 : vector<8x128xi1>, vector<8x128xf32>
    %c0_23 = arith.constant 0 : index
    %c0_24 = arith.constant 0 : index
    %89 = vector.load %arg4[%c0_23, %c0_24] : memref<8x128xf32, #tpu.memory_space<vmem>>, vector<8x128xf32>
    tpu.vector_store %arg4[%c0_23, %c0_24], %88 {strides = array<i32>} : memref<8x128xf32, #tpu.memory_space<vmem>>, vector<8x128xf32>,
    return
  }
  func.func @transform_0(%arg0: i32) -> (i32, i32) {
    %c0_i32 = arith.constant 0 : i32
    %c0_i32_0 = arith.constant 0 : i32
    return %arg0, %c0_i32 : i32, i32
  }
  func.func @transform_1(%arg0: i32) -> (i32, i32, i32) {
    %c0_i32 = arith.constant 0 : i32
    %c0_i32_0 = arith.constant 0 : i32
    %c0_i32_1 = arith.constant 0 : i32
    %c0_i32_2 = arith.constant 0 : i32
    return %c0_i32, %c0_i32_0, %c0_i32_1 : i32, i32, i32
  }
  func.func @transform_2(%arg0: i32) -> (i32, i32) {
    %c0_i32 = arith.constant 0 : i32
    %c0_i32_0 = arith.constant 0 : i32
    %c0_i32_1 = arith.constant 0 : i32
    return %c0_i32, %c0_i32_0 : i32, i32
  }
  func.func @transform_3(%arg0: i32) -> (i32, i32) {
    %c0_i32 = arith.constant 0 : i32
    %c0_i32_0 = arith.constant 0 : i32
    return %arg0, %c0_i32 : i32, i32
  }
}

</mosaic_0001>

<llo_original>
// kernel: vae_forward.1
$region0: #{vae_forward.1}
  #allocation0 [shape = 'u32[]', space=smem, size = 0x4, offset = 0x4, fixed_abs, tag = 'smem constant byte address 0x4 - core index']
  #allocation1 [shape = 'u32[144,128]{1,0:T(1,128)}', space=vmem, size = 0x12000, scoped, tag = 'internal scratch']
  %s0 = inlined_call_operand.vmem [shape: f32[8,8], index: 0, kind: input, shape index: {}]
  %s1 = inlined_call_operand.hbm [shape: f32[4,128,128], index: 1, kind: input, shape index: {}]
  %s2 = inlined_call_operand.vmem [shape: f32[16,128], index: 2, kind: input, shape index: {}]
  %s3 = inlined_call_operand.vmem [shape: f32[8,128], index: 3, kind: output, shape index: {}]
  %s4 = sld [smem:[#allocation0]]
  $region26: #{vae_forward.1} parent=0
    _
  %s6 = ssub.s32 1, %s4
  %s7 = scalar_select 0, %s6, %s4
  $region1: #{vae_forward.1} parent=0
    #allocation2 [shape = 'u8[262144]{0}', space=vmem, size = 0x40000, scoped, tag = 'input window, operand 1, single buffered']
    #allocation3 [shape = 's32[1]{0}', space=sflag, size = 0x4, scoped, tag = 'scoped memory for vae_forward.1']
    %8 = vsyncpa [#allocation3], 0
    // Predicated region
    $region2: #{vae_forward.1} parent=1 // pred_check
      _
    $region3: #{vae_forward.1} parent=1 // pred_check_branch
      %10 = sbr.rel (0) target = $region5
    $region4: #{vae_forward.1} parent=1 // pred_region
      _
    $region5: #{vae_forward.1} parent=1 // pred_fallthru
      _
    // Predicated region
    $region6: #{vae_forward.1} parent=1 // pred_check
      _
    $region7: #{vae_forward.1} parent=1 // pred_check_branch
      %12 = sbr.rel (0) target = $region9
    $region8: #{vae_forward.1} parent=1 // pred_region
      %s14 = ssub.s32 8192, 8192
      %15 = vsyncadd [#allocation3], %s14
      %s16 = sshll.u32 [#allocation2], 4
      %s17 = int_to_ptr.vmem [resolvable:$true] %s16
      %22 = dma.hbm_to_vmem [thread:$0]  %s1, 8192, %s17, [#allocation3], 128, 128, 8
    $region9: #{vae_forward.1} parent=1 // pred_fallthru
      _
    // Predicated region
    $region10: #{vae_forward.1} parent=1 // pred_check
      _
    $region11: #{vae_forward.1} parent=1 // pred_check_branch
      %24 = sbr.rel (0) target = $region13
    $region12: #{vae_forward.1} parent=1 // pred_region
      _
    $region13: #{vae_forward.1} parent=1 // pred_fallthru
      _
    // Predicated region
    $region14: #{vae_forward.1} parent=1 // pred_check
      _
    $region15: #{vae_forward.1} parent=1 // pred_check_branch
      %26 = sbr.rel (0) target = $region17
    $region16: #{vae_forward.1} parent=1 // pred_region
      %27 = dma.done [#allocation3], 8192
    $region17: #{vae_forward.1} parent=1 // pred_fallthru
      _
    %v28 = vld [vmem:[%s0] sm:$0xff]
    %v29 = vld [vmem:[%s2] sm:$0xff]
    %v30 = vld [vmem:[%s2 + $0x8] sm:$0xff]
    %32 = vset.pattern.permute.xlu0 0
    %33 = vperm.xlu0 %32, %v28
    %v34 = vpop.permute.xlu0 %33
    %v36 = vlaneseq
    %v37 = vshrl.u32 %v36, 7
    %v38 = vsub.s32 0, %v37
    %v39 = vrot.slane %v29, %v38
    %v40 = vmul.f32 %v34, %v39
    %v41 = vlaneseq
    %v42 = vshrl.u32 %v41, 7
    %v43 = vsub.s32 0, %v42
    %v44 = vrot.slane %v30, %v43
    %v45 = vadd.f32 %v44, %v40
    %46 = vset.pattern.permute.xlu0 1
    %47 = vperm.xlu0 %46, %v28
    %v48 = vpop.permute.xlu0 %47
    %v50 = vlaneseq
    %v51 = vshrl.u32 %v50, 7
    %v52 = vsub.s32 1, %v51
    %v53 = vrot.slane %v29, %v52
    %v54 = vmul.f32 %v48, %v53
    %v55 = vadd.f32 %v45, %v54
    %v56 = vmax.f32 %v55, 0.0
    %v57 = vld [vmem:[#allocation2] sm:$0xff]
    %v58 = vld [vmem:[#allocation2 + $0x8] sm:$0xff]
    %v59 = vld [vmem:[#allocation2 + $0x10] sm:$0xff]
    %v60 = vld [vmem:[#allocation2 + $0x18] sm:$0xff]
    %v61 = vld [vmem:[#allocation2 + $0x20] sm:$0xff]
    %v62 = vld [vmem:[#allocation2 + $0x28] sm:$0xff]
    %v63 = vld [vmem:[#allocation2 + $0x30] sm:$0xff]
    %v64 = vld [vmem:[#allocation2 + $0x38] sm:$0xff]
    %v65 = vld [vmem:[#allocation2 + $0x40] sm:$0xff]
    %v66 = vld [vmem:[#allocation2 + $0x48] sm:$0xff]
    %v67 = vld [vmem:[#allocation2 + $0x50] sm:$0xff]
    %v68 = vld [vmem:[#allocation2 + $0x58] sm:$0xff]
    %v69 = vld [vmem:[#allocation2 + $0x60] sm:$0xff]
    %v70 = vld [vmem:[#allocation2 + $0x68] sm:$0xff]
    %v71 = vld [vmem:[#allocation2 + $0x70] sm:$0xff]
    %v72 = vld [vmem:[#allocation2 + $0x78] sm:$0xff]
    %v73 = vlaneseq
    %v74 = vshrl.u32 %v73, 7
    %v75 = vsub.s32 1, %v74
    %v76 = vrot.slane %v30, %v75
    %77 = vmatprep.subr.mxu0 0.0
    %78 = vmatpush1.msra.mxu0 %v57
    %79 = vmatprep.subr.mxu0 0.0
    %80 = vmatpush1.msra.mxu0 %v58
    %81 = vmatprep.subr.mxu0 0.0
    %82 = vmatpush1.msra.mxu0 %v59
    %83 = vmatprep.subr.mxu0 0.0
    %84 = vmatpush1.msra.mxu0 %v60
    %85 = vmatprep.subr.mxu0 0.0
    %86 = vmatpush1.msra.mxu0 %v61
    %87 = vmatprep.subr.mxu0 0.0
    %88 = vmatpush1.msra.mxu0 %v62
    %89 = vmatprep.subr.mxu0 0.0
    %90 = vmatpush1.msra.mxu0 %v63
    %91 = vmatprep.subr.mxu0 0.0
    %92 = vmatpush1.msra.mxu0 %v64
    %93 = vmatprep.subr.mxu0 0.0
    %94 = vmatpush1.msra.mxu0 %v65
    %95 = vmatprep.subr.mxu0 0.0
    %96 = vmatpush1.msra.mxu0 %v66
    %97 = vmatprep.subr.mxu0 0.0
    %98 = vmatpush1.msra.mxu0 %v67
    %99 = vmatprep.subr.mxu0 0.0
    %100 = vmatpush1.msra.mxu0 %v68
    %101 = vmatprep.subr.mxu0 0.0
    %102 = vmatpush1.msra.mxu0 %v69
    %103 = vmatprep.subr.mxu0 0.0
    %104 = vmatpush1.msra.mxu0 %v70
    %105 = vmatprep.subr.mxu0 0.0
    %106 = vmatpush1.msra.mxu0 %v71
    %107 = vmatprep.subr.mxu0 0.0
    %108 = vmatpush1.msra.mxu0 %v72
    %109 = vmatprep.subr.mxu0 0.0
    %110 = vmatpush1.msra.mxu0 0.0
    %111 = vmatprep.subr.mxu0 0.0
    %112 = vmatpush1.msra.mxu0 0.0
    %113 = vmatprep.subr.mxu0 0.0
    %114 = vmatpush1.msra.mxu0 0.0
    %115 = vmatprep.subr.mxu0 0.0
    %116 = vmatpush1.msra.mxu0 0.0
    %117 = vmatprep.subr.mxu0 0.0
    %118 = vmatpush1.msra.mxu0 0.0
    %119 = vmatprep.subr.mxu0 0.0
    %120 = vmatpush1.msra.mxu0 0.0
    %121 = vmatprep.subr.mxu0 0.0
    %122 = vmatpush1.msra.mxu0 0.0
    %123 = vmatprep.subr.mxu0 0.0
    %124 = vmatpush1.msra.mxu0 0.0
    %125 = vmatprep.subr.mxu0 0.0
    %126 = vmatpush1.msra.mxu0 0.0
    %127 = vmatprep.subr.mxu0 0.0
    %128 = vmatpush1.msra.mxu0 0.0
    %129 = vmatprep.subr.mxu0 0.0
    %130 = vmatpush1.msra.mxu0 0.0
    %131 = vmatprep.subr.mxu0 0.0
    %132 = vmatpush1.msra.mxu0 0.0
    %133 = vmatprep.subr.mxu0 0.0
    %134 = vmatpush1.msra.mxu0 0.0
    %135 = vmatprep.subr.mxu0 0.0
    %136 = vmatpush1.msra.mxu0 0.0
    %137 = vmatprep.subr.mxu0 0.0
    %138 = vmatpush1.msra.mxu0 0.0
    %139 = vmatprep.subr.mxu0 0.0
    %140 = vmatpush1.msra.mxu0 0.0
    %141 = vmatprep.mubr.f32.mxu0 0.0
    %142 = vmatmul.mubr.f32.gmra.mrb[0].mxu0 %v56
    %v143 = vpop.f32.mrb[0].mxu0
    %v144 = vadd.f32 %v76, %v143
    %v145 = vpop.f32.mrb[0].mxu0
    %146 = vdwg.mxu0
    %v147 = vmax.f32 %v144, 0.0
    %s148 = scalar_lea.vmem [#allocation2], 128
    %v149 = vld [vmem:[%s148] sm:$0xff]
    %v150 = vld [vmem:[%s148 + $0x8] sm:$0xff]
    %v151 = vld [vmem:[%s148 + $0x10] sm:$0xff]
    %v152 = vld [vmem:[%s148 + $0x18] sm:$0xff]
    %v153 = vld [vmem:[%s148 + $0x20] sm:$0xff]
    %v154 = vld [vmem:[%s148 + $0x28] sm:$0xff]
    %v155 = vld [vmem:[%s148 + $0x30] sm:$0xff]
    %v156 = vld [vmem:[%s148 + $0x38] sm:$0xff]
    %v157 = vld [vmem:[%s148 + $0x40] sm:$0xff]
    %v158 = vld [vmem:[%s148 + $0x48] sm:$0xff]
    %v159 = vld [vmem:[%s148 + $0x50] sm:$0xff]
    %v160 = vld [vmem:[%s148 + $0x58] sm:$0xff]
    %v161 = vld [vmem:[%s148 + $0x60] sm:$0xff]
    %v162 = vld [vmem:[%s148 + $0x68] sm:$0xff]
    %v163 = vld [vmem:[%s148 + $0x70] sm:$0xff]
    %v164 = vld [vmem:[%s148 + $0x78] sm:$0xff]
    %v165 = vlaneseq
    %v166 = vshrl.u32 %v165, 7
    %v167 = vsub.s32 2, %v166
    %v168 = vrot.slane %v30, %v167
    %169 = vmatprep.subr.mxu0 0.0
    %170 = vmatpush1.msra.mxu0 %v149
    %171 = vmatprep.subr.mxu0 0.0
    %172 = vmatpush1.msra.mxu0 %v150
    %173 = vmatprep.subr.mxu0 0.0
    %174 = vmatpush1.msra.mxu0 %v151
    %175 = vmatprep.subr.mxu0 0.0
    %176 = vmatpush1.msra.mxu0 %v152
    %177 = vmatprep.subr.mxu0 0.0
    %178 = vmatpush1.msra.mxu0 %v153
    %179 = vmatprep.subr.mxu0 0.0
    %180 = vmatpush1.msra.mxu0 %v154
    %181 = vmatprep.subr.mxu0 0.0
    %182 = vmatpush1.msra.mxu0 %v155
    %183 = vmatprep.subr.mxu0 0.0
    %184 = vmatpush1.msra.mxu0 %v156
    %185 = vmatprep.subr.mxu0 0.0
    %186 = vmatpush1.msra.mxu0 %v157
    %187 = vmatprep.subr.mxu0 0.0
    %188 = vmatpush1.msra.mxu0 %v158
    %189 = vmatprep.subr.mxu0 0.0
    %190 = vmatpush1.msra.mxu0 %v159
    %191 = vmatprep.subr.mxu0 0.0
    %192 = vmatpush1.msra.mxu0 %v160
    %193 = vmatprep.subr.mxu0 0.0
    %194 = vmatpush1.msra.mxu0 %v161
    %195 = vmatprep.subr.mxu0 0.0
    %196 = vmatpush1.msra.mxu0 %v162
    %197 = vmatprep.subr.mxu0 0.0
    %198 = vmatpush1.msra.mxu0 %v163
    %199 = vmatprep.subr.mxu0 0.0
    %200 = vmatpush1.msra.mxu0 %v164
    %201 = vmatprep.subr.mxu0 0.0
    %202 = vmatpush1.msra.mxu0 0.0
    %203 = vmatprep.subr.mxu0 0.0
    %204 = vmatpush1.msra.mxu0 0.0
    %205 = vmatprep.subr.mxu0 0.0
    %206 = vmatpush1.msra.mxu0 0.0
    %207 = vmatprep.subr.mxu0 0.0
    %208 = vmatpush1.msra.mxu0 0.0
    %209 = vmatprep.subr.mxu0 0.0
    %210 = vmatpush1.msra.mxu0 0.0
    %211 = vmatprep.subr.mxu0 0.0
    %212 = vmatpush1.msra.mxu0 0.0
    %213 = vmatprep.subr.mxu0 0.0
    %214 = vmatpush1.msra.mxu0 0.0
    %215 = vmatprep.subr.mxu0 0.0
    %216 = vmatpush1.msra.mxu0 0.0
    %217 = vmatprep.subr.mxu0 0.0
    %218 = vmatpush1.msra.mxu0 0.0
    %219 = vmatprep.subr.mxu0 0.0
    %220 = vmatpush1.msra.mxu0 0.0
    %221 = vmatprep.subr.mxu0 0.0
    %222 = vmatpush1.msra.mxu0 0.0
    %223 = vmatprep.subr.mxu0 0.0
    %224 = vmatpush1.msra.mxu0 0.0
    %225 = vmatprep.subr.mxu0 0.0
    %226 = vmatpush1.msra.mxu0 0.0
    %227 = vmatprep.subr.mxu0 0.0
    %228 = vmatpush1.msra.mxu0 0.0
    %229 = vmatprep.subr.mxu0 0.0
    %230 = vmatpush1.msra.mxu0 0.0
    %231 = vmatprep.subr.mxu0 0.0
    %232 = vmatpush1.msra.mxu0 0.0
    %233 = vmatprep.mubr.f32.mxu0 0.0
    %234 = vmatmul.mubr.f32.gmra.mrb[0].mxu0 %v147
    %v235 = vpop.f32.mrb[0].mxu0
    %v236 = vadd.f32 %v168, %v235
    %v237 = vpop.f32.mrb[0].mxu0
    %238 = vdwg.mxu0
    %v239 = vmul.f32 %v236, 0.5
    %v240 = vmul.f32 %v239, 1.442695
    %v241 = vpow.pop %v240
    %243 = vrot.lane.b32.xlu0 %v241, 68
    %v244 = vpop.permute.xlu0 %243
    %v246 = vmul.f32 %v28, %v244
    %248 = vrot.lane.b32.xlu0 %v246, 124
    %v249 = vpop.permute.xlu0 %248
    %v251 = vadd.f32 %v236, %v249
    %253 = vset.pattern.permute.xlu0 0
    %254 = vperm.xlu0 %253, %v251
    %v255 = vpop.permute.xlu0 %254
    %v257 = vlaneseq
    %v258 = vshrl.u32 %v257, 7
    %v259 = vsub.s32 2, %v258
    %v260 = vrot.slane %v29, %v259
    %v261 = vmul.f32 %v255, %v260
    %v262 = vlaneseq
    %v263 = vshrl.u32 %v262, 7
    %v264 = vsub.s32 3, %v263
    %v265 = vrot.slane %v30, %v264
    %v266 = vadd.f32 %v265, %v261
    %267 = vset.pattern.permute.xlu0 1
    %268 = vperm.xlu0 %267, %v251
    %v269 = vpop.permute.xlu0 %268
    %v271 = vlaneseq
    %v272 = vshrl.u32 %v271, 7
    %v273 = vsub.s32 3, %v272
    %v274 = vrot.slane %v29, %v273
    %v275 = vmul.f32 %v269, %v274
    %v276 = vadd.f32 %v266, %v275
    %v277 = vmax.f32 %v276, 0.0
    %s278 = scalar_lea.vmem [#allocation2], 256
    %v279 = vld [vmem:[%s278] sm:$0xff]
    %v280 = vld [vmem:[%s278 + $0x8] sm:$0xff]
    %v281 = vld [vmem:[%s278 + $0x10] sm:$0xff]
    %v282 = vld [vmem:[%s278 + $0x18] sm:$0xff]
    %v283 = vld [vmem:[%s278 + $0x20] sm:$0xff]
    %v284 = vld [vmem:[%s278 + $0x28] sm:$0xff]
    %v285 = vld [vmem:[%s278 + $0x30] sm:$0xff]
    %v286 = vld [vmem:[%s278 + $0x38] sm:$0xff]
    %v287 = vld [vmem:[%s278 + $0x40] sm:$0xff]
    %v288 = vld [vmem:[%s278 + $0x48] sm:$0xff]
    %v289 = vld [vmem:[%s278 + $0x50] sm:$0xff]
    %v290 = vld [vmem:[%s278 + $0x58] sm:$0xff]
    %v291 = vld [vmem:[%s278 + $0x60] sm:$0xff]
    %v292 = vld [vmem:[%s278 + $0x68] sm:$0xff]
    %v293 = vld [vmem:[%s278 + $0x70] sm:$0xff]
    %v294 = vld [vmem:[%s278 + $0x78] sm:$0xff]
    %v295 = vlaneseq
    %v296 = vshrl.u32 %v295, 7
    %v297 = vsub.s32 4, %v296
    %v298 = vrot.slane %v30, %v297
    %299 = vmatprep.subr.mxu0 0.0
    %300 = vmatpush1.msra.mxu0 %v279
    %301 = vmatprep.subr.mxu0 0.0
    %302 = vmatpush1.msra.mxu0 %v280
    %303 = vmatprep.subr.mxu0 0.0
    %304 = vmatpush1.msra.mxu0 %v281
    %305 = vmatprep.subr.mxu0 0.0
    %306 = vmatpush1.msra.mxu0 %v282
    %307 = vmatprep.subr.mxu0 0.0
    %308 = vmatpush1.msra.mxu0 %v283
    %309 = vmatprep.subr.mxu0 0.0
    %310 = vmatpush1.msra.mxu0 %v284
    %311 = vmatprep.subr.mxu0 0.0
    %312 = vmatpush1.msra.mxu0 %v285
    %313 = vmatprep.subr.mxu0 0.0
    %314 = vmatpush1.msra.mxu0 %v286
    %315 = vmatprep.subr.mxu0 0.0
    %316 = vmatpush1.msra.mxu0 %v287
    %317 = vmatprep.subr.mxu0 0.0
    %318 = vmatpush1.msra.mxu0 %v288
    %319 = vmatprep.subr.mxu0 0.0
    %320 = vmatpush1.msra.mxu0 %v289
    %321 = vmatprep.subr.mxu0 0.0
    %322 = vmatpush1.msra.mxu0 %v290
    %323 = vmatprep.subr.mxu0 0.0
    %324 = vmatpush1.msra.mxu0 %v291
    %325 = vmatprep.subr.mxu0 0.0
    %326 = vmatpush1.msra.mxu0 %v292
    %327 = vmatprep.subr.mxu0 0.0
    %328 = vmatpush1.msra.mxu0 %v293
    %329 = vmatprep.subr.mxu0 0.0
    %330 = vmatpush1.msra.mxu0 %v294
    %331 = vmatprep.subr.mxu0 0.0
    %332 = vmatpush1.msra.mxu0 0.0
    %333 = vmatprep.subr.mxu0 0.0
    %334 = vmatpush1.msra.mxu0 0.0
    %335 = vmatprep.subr.mxu0 0.0
    %336 = vmatpush1.msra.mxu0 0.0
    %337 = vmatprep.subr.mxu0 0.0
    %338 = vmatpush1.msra.mxu0 0.0
    %339 = vmatprep.subr.mxu0 0.0
    %340 = vmatpush1.msra.mxu0 0.0
    %341 = vmatprep.subr.mxu0 0.0
    %342 = vmatpush1.msra.mxu0 0.0
    %343 = vmatprep.subr.mxu0 0.0
    %344 = vmatpush1.msra.mxu0 0.0
    %345 = vmatprep.subr.mxu0 0.0
    %346 = vmatpush1.msra.mxu0 0.0
    %347 = vmatprep.subr.mxu0 0.0
    %348 = vmatpush1.msra.mxu0 0.0
    %349 = vmatprep.subr.mxu0 0.0
    %350 = vmatpush1.msra.mxu0 0.0
    %351 = vmatprep.subr.mxu0 0.0
    %352 = vmatpush1.msra.mxu0 0.0
    %353 = vmatprep.subr.mxu0 0.0
    %354 = vmatpush1.msra.mxu0 0.0
    %355 = vmatprep.subr.mxu0 0.0
    %356 = vmatpush1.msra.mxu0 0.0
    %357 = vmatprep.subr.mxu0 0.0
    %358 = vmatpush1.msra.mxu0 0.0
    %359 = vmatprep.subr.mxu0 0.0
    %360 = vmatpush1.msra.mxu0 0.0
    %361 = vmatprep.subr.mxu0 0.0
    %362 = vmatpush1.msra.mxu0 0.0
    %363 = vmatprep.mubr.f32.mxu0 0.0
    %364 = vmatmul.mubr.f32.gmra.mrb[0].mxu0 %v277
    %v365 = vpop.f32.mrb[0].mxu0
    %v366 = vadd.f32 %v298, %v365
    %v367 = vpop.f32.mrb[0].mxu0
    %368 = vdwg.mxu0
    %v369 = vmax.f32 %v366, 0.0
    %s370 = scalar_lea.vmem [#allocation2], 384
    %v371 = vld [vmem:[%s370] sm:$0xff]
    %v372 = vld [vmem:[%s370 + $0x8] sm:$0xff]
    %v373 = vld [vmem:[%s370 + $0x10] sm:$0xff]
    %v374 = vld [vmem:[%s370 + $0x18] sm:$0xff]
    %v375 = vld [vmem:[%s370 + $0x20] sm:$0xff]
    %v376 = vld [vmem:[%s370 + $0x28] sm:$0xff]
    %v377 = vld [vmem:[%s370 + $0x30] sm:$0xff]
    %v378 = vld [vmem:[%s370 + $0x38] sm:$0xff]
    %v379 = vld [vmem:[%s370 + $0x40] sm:$0xff]
    %v380 = vld [vmem:[%s370 + $0x48] sm:$0xff]
    %v381 = vld [vmem:[%s370 + $0x50] sm:$0xff]
    %v382 = vld [vmem:[%s370 + $0x58] sm:$0xff]
    %v383 = vld [vmem:[%s370 + $0x60] sm:$0xff]
    %v384 = vld [vmem:[%s370 + $0x68] sm:$0xff]
    %v385 = vld [vmem:[%s370 + $0x70] sm:$0xff]
    %v386 = vld [vmem:[%s370 + $0x78] sm:$0xff]
    %v387 = vlaneseq
    %v388 = vshrl.u32 %v387, 7
    %v389 = vsub.s32 5, %v388
    %v390 = vrot.slane %v30, %v389
    %391 = vmatprep.subr.mxu0 0.0
    %392 = vmatpush1.msra.mxu0 %v371
    %393 = vmatprep.subr.mxu0 0.0
    %394 = vmatpush1.msra.mxu0 %v372
    %395 = vmatprep.subr.mxu0 0.0
    %396 = vmatpush1.msra.mxu0 %v373
    %397 = vmatprep.subr.mxu0 0.0
    %398 = vmatpush1.msra.mxu0 %v374
    %399 = vmatprep.subr.mxu0 0.0
    %400 = vmatpush1.msra.mxu0 %v375
    %401 = vmatprep.subr.mxu0 0.0
    %402 = vmatpush1.msra.mxu0 %v376
    %403 = vmatprep.subr.mxu0 0.0
    %404 = vmatpush1.msra.mxu0 %v377
    %405 = vmatprep.subr.mxu0 0.0
    %406 = vmatpush1.msra.mxu0 %v378
    %407 = vmatprep.subr.mxu0 0.0
    %408 = vmatpush1.msra.mxu0 %v379
    %409 = vmatprep.subr.mxu0 0.0
    %410 = vmatpush1.msra.mxu0 %v380
    %411 = vmatprep.subr.mxu0 0.0
    %412 = vmatpush1.msra.mxu0 %v381
    %413 = vmatprep.subr.mxu0 0.0
    %414 = vmatpush1.msra.mxu0 %v382
    %415 = vmatprep.subr.mxu0 0.0
    %416 = vmatpush1.msra.mxu0 %v383
    %417 = vmatprep.subr.mxu0 0.0
    %418 = vmatpush1.msra.mxu0 %v384
    %419 = vmatprep.subr.mxu0 0.0
    %420 = vmatpush1.msra.mxu0 %v385
    %421 = vmatprep.subr.mxu0 0.0
    %422 = vmatpush1.msra.mxu0 %v386
    %423 = vmatprep.subr.mxu0 0.0
    %424 = vmatpush1.msra.mxu0 0.0
    %425 = vmatprep.subr.mxu0 0.0
    %426 = vmatpush1.msra.mxu0 0.0
    %427 = vmatprep.subr.mxu0 0.0
    %428 = vmatpush1.msra.mxu0 0.0
    %429 = vmatprep.subr.mxu0 0.0
    %430 = vmatpush1.msra.mxu0 0.0
    %431 = vmatprep.subr.mxu0 0.0
    %432 = vmatpush1.msra.mxu0 0.0
    %433 = vmatprep.subr.mxu0 0.0
    %434 = vmatpush1.msra.mxu0 0.0
    %435 = vmatprep.subr.mxu0 0.0
    %436 = vmatpush1.msra.mxu0 0.0
    %437 = vmatprep.subr.mxu0 0.0
    %438 = vmatpush1.msra.mxu0 0.0
    %439 = vmatprep.subr.mxu0 0.0
    %440 = vmatpush1.msra.mxu0 0.0
    %441 = vmatprep.subr.mxu0 0.0
    %442 = vmatpush1.msra.mxu0 0.0
    %443 = vmatprep.subr.mxu0 0.0
    %444 = vmatpush1.msra.mxu0 0.0
    %445 = vmatprep.subr.mxu0 0.0
    %446 = vmatpush1.msra.mxu0 0.0
    %447 = vmatprep.subr.mxu0 0.0
    %448 = vmatpush1.msra.mxu0 0.0
    %449 = vmatprep.subr.mxu0 0.0
    %450 = vmatpush1.msra.mxu0 0.0
    %451 = vmatprep.subr.mxu0 0.0
    %452 = vmatpush1.msra.mxu0 0.0
    %453 = vmatprep.subr.mxu0 0.0
    %454 = vmatpush1.msra.mxu0 0.0
    %455 = vmatprep.mubr.f32.mxu0 0.0
    %456 = vmatmul.mubr.f32.gmra.mrb[0].mxu0 %v369
    %v457 = vpop.f32.mrb[0].mxu0
    %v458 = vadd.f32 %v390, %v457
    %v459 = vpop.f32.mrb[0].mxu0
    %460 = vdwg.mxu0
    %v461 = vsub.f32 0.0, %v458
    %v462 = vmul.f32 %v461, 1.442695
    %v463 = vpow.pop %v462
    %v464 = vadd.f32 %v463, 1.0
    %v465 = vrcp.pop %v464
    %v466 = vlaneseq
    %v467 = vand.u32 %v466, 127
    %vm468 = vcmp.ge.s32.totalorder %v467, 96
    %vm469 = vcmp.lt.s32.totalorder %v467, 98
    %vm470 = vmand %vm468, %vm469
    %v471 = vsel %vm470, %v465, %v236
    %472 = vst [vmem:[%s3] sm:$0xff] %v471
    // Predicated region
    $region18: #{vae_forward.1} parent=1 // pred_check
      _
    $region19: #{vae_forward.1} parent=1 // pred_check_branch
      %474 = sbr.rel (0) target = $region21
    $region20: #{vae_forward.1} parent=1 // pred_region
      _
    $region21: #{vae_forward.1} parent=1 // pred_fallthru
      _
    // Predicated region
    $region22: #{vae_forward.1} parent=1 // pred_check
      _
    $region23: #{vae_forward.1} parent=1 // pred_check_branch
      %476 = sbr.rel (0) target = $region25
    $region24: #{vae_forward.1} parent=1 // pred_region
      _
    $region25: #{vae_forward.1} parent=1 // pred_fallthru
      _
    %477 = vsyncpa [#allocation3], 1

</llo_original>
